<compile_context>
chip_gen: v6e
topology: v6e:2x2x1
jax: 0.10.0
libtpu: 0.0.40
codegen_flags: <defaults>
</compile_context>

<pallas_src>
import functools

import jax
import jax.numpy as jnp
from jax import lax
from jax.experimental import pallas as pl
from jax.experimental.pallas import tpu as pltpu


def _conv_conv_stats_kernel(w1_ref, w2_ref, x_ref, z_ref, stats_ref,
                            xb_ref, y1b_ref, *, K, p):
    """Per (n, c) plane: pad -> dwconv1 -> ReLU -> pad -> dwconv2 (+ BN stats).

    w1_ref, w2_ref : SMEM (C, K*K) depthwise filter scalars
    x_ref          : VMEM (H, W)   input plane for this (n, c)
    z_ref          : VMEM (H2, W2) conv2 output (pre-BN), f32
    stats_ref      : VMEM (2, W2)  lane-partial [sum; sum-of-squares]
    xb_ref, y1b_ref: VMEM scratch, padded conv inputs
    """
    c = pl.program_id(1)

    H, W = x_ref.shape
    Hp, Wp = xb_ref.shape                     # H + 2p, W + 2p
    H1, W1 = Hp - (K - 1), Wp - (K - 1)       # conv1 output extent
    H2, W2 = z_ref.shape                      # conv2 (final) output extent

    # ---- zero-padded conv1 input (in-kernel padding) ----
    xb_ref[...] = jnp.zeros_like(xb_ref)
    xb_ref[p:p + H, p:p + W] = x_ref[...].astype(jnp.float32)
    xb = xb_ref[...]

    # ---- depthwise conv #1 ('valid' over padded tile), scalar SMEM taps ----
    acc1 = jnp.zeros((H1, W1), jnp.float32)
    for kh in range(K):
        for kw in range(K):
            acc1 = acc1 + xb[kh:kh + H1, kw:kw + W1] * w1_ref[c, kh * K + kw]

    # ---- ReLU, then re-pad into a pre-zeroed scratch (inter-conv padding) ----
    y1b_ref[...] = jnp.zeros_like(y1b_ref)
    y1b_ref[p:p + H1, p:p + W1] = jnp.maximum(acc1, 0.0)
    y1 = y1b_ref[...]

    # ---- depthwise conv #2 ('valid') ----
    acc2 = jnp.zeros((H2, W2), jnp.float32)
    for kh in range(K):
        for kw in range(K):
            acc2 = acc2 + y1[kh:kh + H2, kw:kw + W2] * w2_ref[c, kh * K + kw]

    z_ref[...] = acc2

    # ---- lane-partial BatchNorm statistics (reduced to (C,) in the wrapper) --
    stats_ref[0:1, :] = jnp.sum(acc2, axis=0, keepdims=True)
    stats_ref[1:2, :] = jnp.sum(acc2 * acc2, axis=0, keepdims=True)


def _bn_relu_kernel(scale_ref, shift_ref, z_ref, o_ref):
    """Per (n, c) plane: o = max(z * scale[c] + shift[c], 0)."""
    c = pl.program_id(1)
    y = z_ref[...] * scale_ref[c] + shift_ref[c]
    o_ref[...] = jnp.maximum(y, 0.0).astype(o_ref.dtype)


def depth_conv_forward(x_nchw, w1, w2, gamma, beta, *, kernel_size, padding,
                       eps=1e-5):
    """DepthConv forward. x_nchw: (N,C,H,W); w1,w2: (C,1,K,K) torch-style."""
    N, C, H, W = x_nchw.shape
    K, p = kernel_size, padding
    H1, W1 = H + 2 * p - (K - 1), W + 2 * p - (K - 1)
    H2, W2 = H1 + 2 * p - (K - 1), W1 + 2 * p - (K - 1)
    out_dtype = x_nchw.dtype

    # torch depthwise weights (C, 1, K, K) -> flat (C, K*K) scalars in SMEM.
    w1f = w1.reshape(C, K * K).astype(jnp.float32)
    w2f = w2.reshape(C, K * K).astype(jnp.float32)

    smem = pl.BlockSpec(memory_space=pltpu.MemorySpace.SMEM)
    plane_in = pl.BlockSpec((None, None, H, W), lambda n, c: (n, c, 0, 0))
    plane_out = pl.BlockSpec((None, None, H2, W2), lambda n, c: (n, c, 0, 0))
    stats_spec = pl.BlockSpec((None, None, 2, W2), lambda n, c: (n, c, 0, 0))
    parallel2 = pltpu.CompilerParams(
        dimension_semantics=("parallel", "parallel"))

    # ---- pass 1: conv1 + ReLU + conv2, plus per-(n,c) partial BN stats ----
    conv_kernel = functools.partial(_conv_conv_stats_kernel, K=K, p=p)
    z, stats = pl.pallas_call(
        conv_kernel,
        grid=(N, C),
        in_specs=[smem, smem, plane_in],
        out_specs=[plane_out, stats_spec],
        out_shape=[
            jax.ShapeDtypeStruct((N, C, H2, W2), jnp.float32),
            jax.ShapeDtypeStruct((N, C, 2, W2), jnp.float32),
        ],
        scratch_shapes=[
            pltpu.VMEM((H + 2 * p, W + 2 * p), jnp.float32),
            pltpu.VMEM((H1 + 2 * p, W1 + 2 * p), jnp.float32),
        ],
        compiler_params=parallel2,
    )(w1f, w2f, x_nchw)

    # ---- finish global BatchNorm statistics (tiny (C,)-sized math) ----
    count = float(N * H2 * W2)
    sums = jnp.sum(stats, axis=(0, 3))                        # (C, 2)
    mean = sums[:, 0] / count
    var = jnp.maximum(sums[:, 1] / count - mean * mean, 0.0)  # biased variance
    scale = gamma.astype(jnp.float32) * lax.rsqrt(var + eps)
    shift = beta.astype(jnp.float32) - mean * scale

    # ---- pass 2: normalize + affine + ReLU ----
    out = pl.pallas_call(
        _bn_relu_kernel,
        grid=(N, C),
        in_specs=[smem, smem, plane_out],
        out_specs=plane_out,
        out_shape=jax.ShapeDtypeStruct((N, C, H2, W2), out_dtype),
        compiler_params=parallel2,
    )(scale, shift, z)
    return out


def depth_conv_reference(x_nchw, w1, w2, gamma, beta, *, padding, eps=1e-5):
    """Pure-JAX reference (lax.conv) for correctness checking."""
    C = x_nchw.shape[1]
    x = jnp.transpose(x_nchw, (0, 2, 3, 1))

    def dwconv(x_nhwc, w_torch):
        w = jnp.transpose(w_torch, (2, 3, 1, 0))  # (K, K, 1, C) HWIO
        return lax.conv_general_dilated(
            x_nhwc, w, (1, 1), ((padding, padding), (padding, padding)),
            dimension_numbers=("NHWC", "HWIO", "NHWC"),
            feature_group_count=C)

    y = jnp.maximum(dwconv(x, w1), 0.0)
    y = dwconv(y, w2)
    mean = jnp.mean(y, axis=(0, 1, 2), keepdims=True)
    var = jnp.mean((y - mean) ** 2, axis=(0, 1, 2), keepdims=True)
    y = ((y - mean) * lax.rsqrt(var + eps) * gamma.reshape(1, 1, 1, C)
         + beta.reshape(1, 1, 1, C))
    y = jnp.maximum(y, 0.0)
    return jnp.transpose(y, (0, 3, 1, 2))


if __name__ == "__main__":
    N, C, H, W = 2, 4, 16, 16          # in_channels == out_channels == 4
    K, PAD = 3, 1                      # kernel_size=3, stride=1, padding=1

    key = jax.random.PRNGKey(0)
    k1, k2, k3, k4, k5 = jax.random.split(key, 5)
    x = jax.random.normal(k1, (N, C, H, W), jnp.float32)
    w1 = 0.4 * jax.random.normal(k2, (C, 1, K, K), jnp.float32)   # dw conv1
    w2 = 0.4 * jax.random.normal(k3, (C, 1, K, K), jnp.float32)   # dw conv2
    gamma = 1.0 + 0.1 * jax.random.normal(k4, (C,), jnp.float32)  # BN weight
    beta = 0.1 * jax.random.normal(k5, (C,), jnp.float32)         # BN bias

    out = depth_conv_forward(x, w1, w2, gamma, beta, kernel_size=K, padding=PAD)
    out = jax.block_until_ready(out)

    ref = depth_conv_reference(x, w1, w2, gamma, beta, padding=PAD)
    assert out.shape == ref.shape, (out.shape, ref.shape)
    assert out.dtype == x.dtype, (out.dtype, x.dtype)
    assert jnp.allclose(out, ref, atol=5e-4, rtol=5e-4), float(
        jnp.max(jnp.abs(out - ref)))
    print("KERNEL_OK")
</pallas_src>

<mosaic_0001>
module attributes {stable_mosaic.version = 11 : i64} {
  func.func @_conv_conv_stats_kernel(%arg0: i32, %arg1: i32, %arg2: memref<4x9xf32, #tpu.memory_space<smem>>, %arg3: memref<4x9xf32, #tpu.memory_space<smem>>, %arg4: memref<1x1x16x16xf32, #tpu.memory_space<vmem>>, %arg5: memref<1x1x16x16xf32, #tpu.memory_space<vmem>>, %arg6: memref<1x1x2x16xf32, #tpu.memory_space<vmem>>, %arg7: memref<18x18xf32, #tpu.memory_space<vmem>>, %arg8: memref<18x18xf32, #tpu.memory_space<vmem>>) attributes {dimension_semantics = [#tpu.dimension_semantics<parallel>, #tpu.dimension_semantics<parallel>], iteration_bounds = array<i64: 2, 4>, scalar_prefetch = 0 : i64, scratch_operands = 2 : i64, tpu.core_type = #tpu.core_type<tc>, window_params = [{transform_indices = @transform_0, window_bounds = array<i64: 4, 9>}, {transform_indices = @transform_1, window_bounds = array<i64: 4, 9>}, {transform_indices = @transform_2, window_bounds = array<i64: 1, 1, 16, 16>}, {transform_indices = @transform_3, window_bounds = array<i64: 1, 1, 16, 16>}, {transform_indices = @transform_4, window_bounds = array<i64: 1, 1, 2, 16>}]} {
    %cst = arith.constant 0.000000e+00 : f32
    %0 = vector.broadcast %cst : f32 to vector<18x18xf32>
    %c0 = arith.constant 0 : index
    %c0_0 = arith.constant 0 : index
    %1 = vector.load %arg7[%c0, %c0_0] : memref<18x18xf32, #tpu.memory_space<vmem>>, vector<18x18xf32>
    tpu.vector_store %arg7[%c0, %c0_0], %0 {strides = array<i32>} : memref<18x18xf32, #tpu.memory_space<vmem>>, vector<18x18xf32>,
    %c0_1 = arith.constant 0 : index
    %c0_2 = arith.constant 0 : index
    %c0_3 = arith.constant 0 : index
    %c0_4 = arith.constant 0 : index
    %2 = vector.load %arg4[%c0_1, %c0_2, %c0_3, %c0_4] : memref<1x1x16x16xf32, #tpu.memory_space<vmem>>, vector<1x1x16x16xf32>
    %3 = vector.shape_cast %2 : vector<1x1x16x16xf32> to vector<16x16xf32>
    %c1 = arith.constant 1 : index
    %c1_5 = arith.constant 1 : index
    %4 = vector.load %arg7[%c1, %c1_5] : memref<18x18xf32, #tpu.memory_space<vmem>>, vector<16x16xf32>
    tpu.vector_store %arg7[%c1, %c1_5], %3 {strides = array<i32>} : memref<18x18xf32, #tpu.memory_space<vmem>>, vector<16x16xf32>,
    %c0_6 = arith.constant 0 : index
    %c0_7 = arith.constant 0 : index
    %5 = vector.load %arg7[%c0_6, %c0_7] : memref<18x18xf32, #tpu.memory_space<vmem>>, vector<18x18xf32>
    %cst_8 = arith.constant 0.000000e+00 : f32
    %6 = vector.broadcast %cst_8 : f32 to vector<16x16xf32>
    %7 = vector.extract_strided_slice %5 {offsets = [0, 0], sizes = [16, 16], strides = [1, 1]} : vector<18x18xf32> to vector<16x16xf32>
    %8 = arith.index_cast %arg1 : i32 to index
    %c0_9 = arith.constant 0 : index
    %9 = memref.load %arg2[%8, %c0_9] : memref<4x9xf32, #tpu.memory_space<smem>>
    %10 = vector.broadcast %9 : f32 to vector<16x16xf32>
    %11 = arith.mulf %7, %10 : vector<16x16xf32>
    %12 = arith.addf %6, %11 : vector<16x16xf32>
    %13 = vector.extract_strided_slice %5 {offsets = [0, 1], sizes = [16, 16], strides = [1, 1]} : vector<18x18xf32> to vector<16x16xf32>
    %14 = arith.index_cast %arg1 : i32 to index
    %c1_10 = arith.constant 1 : index
    %15 = memref.load %arg2[%14, %c1_10] : memref<4x9xf32, #tpu.memory_space<smem>>
    %16 = vector.broadcast %15 : f32 to vector<16x16xf32>
    %17 = arith.mulf %13, %16 : vector<16x16xf32>
    %18 = arith.addf %12, %17 : vector<16x16xf32>
    %19 = vector.extract_strided_slice %5 {offsets = [0, 2], sizes = [16, 16], strides = [1, 1]} : vector<18x18xf32> to vector<16x16xf32>
    %20 = arith.index_cast %arg1 : i32 to index
    %c2 = arith.constant 2 : index
    %21 = memref.load %arg2[%20, %c2] : memref<4x9xf32, #tpu.memory_space<smem>>
    %22 = vector.broadcast %21 : f32 to vector<16x16xf32>
    %23 = arith.mulf %19, %22 : vector<16x16xf32>
    %24 = arith.addf %18, %23 : vector<16x16xf32>
    %25 = vector.extract_strided_slice %5 {offsets = [1, 0], sizes = [16, 16], strides = [1, 1]} : vector<18x18xf32> to vector<16x16xf32>
    %26 = arith.index_cast %arg1 : i32 to index
    %c3 = arith.constant 3 : index
    %27 = memref.load %arg2[%26, %c3] : memref<4x9xf32, #tpu.memory_space<smem>>
    %28 = vector.broadcast %27 : f32 to vector<16x16xf32>
    %29 = arith.mulf %25, %28 : vector<16x16xf32>
    %30 = arith.addf %24, %29 : vector<16x16xf32>
    %31 = vector.extract_strided_slice %5 {offsets = [1, 1], sizes = [16, 16], strides = [1, 1]} : vector<18x18xf32> to vector<16x16xf32>
    %32 = arith.index_cast %arg1 : i32 to index
    %c4 = arith.constant 4 : index
    %33 = memref.load %arg2[%32, %c4] : memref<4x9xf32, #tpu.memory_space<smem>>
    %34 = vector.broadcast %33 : f32 to vector<16x16xf32>
    %35 = arith.mulf %31, %34 : vector<16x16xf32>
    %36 = arith.addf %30, %35 : vector<16x16xf32>
    %37 = vector.extract_strided_slice %5 {offsets = [1, 2], sizes = [16, 16], strides = [1, 1]} : vector<18x18xf32> to vector<16x16xf32>
    %38 = arith.index_cast %arg1 : i32 to index
    %c5 = arith.constant 5 : index
    %39 = memref.load %arg2[%38, %c5] : memref<4x9xf32, #tpu.memory_space<smem>>
    %40 = vector.broadcast %39 : f32 to vector<16x16xf32>
    %41 = arith.mulf %37, %40 : vector<16x16xf32>
    %42 = arith.addf %36, %41 : vector<16x16xf32>
    %43 = vector.extract_strided_slice %5 {offsets = [2, 0], sizes = [16, 16], strides = [1, 1]} : vector<18x18xf32> to vector<16x16xf32>
    %44 = arith.index_cast %arg1 : i32 to index
    %c6 = arith.constant 6 : index
    %45 = memref.load %arg2[%44, %c6] : memref<4x9xf32, #tpu.memory_space<smem>>
    %46 = vector.broadcast %45 : f32 to vector<16x16xf32>
    %47 = arith.mulf %43, %46 : vector<16x16xf32>
    %48 = arith.addf %42, %47 : vector<16x16xf32>
    %49 = vector.extract_strided_slice %5 {offsets = [2, 1], sizes = [16, 16], strides = [1, 1]} : vector<18x18xf32> to vector<16x16xf32>
    %50 = arith.index_cast %arg1 : i32 to index
    %c7 = arith.constant 7 : index
    %51 = memref.load %arg2[%50, %c7] : memref<4x9xf32, #tpu.memory_space<smem>>
    %52 = vector.broadcast %51 : f32 to vector<16x16xf32>
    %53 = arith.mulf %49, %52 : vector<16x16xf32>
    %54 = arith.addf %48, %53 : vector<16x16xf32>
    %55 = vector.extract_strided_slice %5 {offsets = [2, 2], sizes = [16, 16], strides = [1, 1]} : vector<18x18xf32> to vector<16x16xf32>
    %56 = arith.index_cast %arg1 : i32 to index
    %c8 = arith.constant 8 : index
    %57 = memref.load %arg2[%56, %c8] : memref<4x9xf32, #tpu.memory_space<smem>>
    %58 = vector.broadcast %57 : f32 to vector<16x16xf32>
    %59 = arith.mulf %55, %58 : vector<16x16xf32>
    %60 = arith.addf %54, %59 : vector<16x16xf32>
    %cst_11 = arith.constant 0.000000e+00 : f32
    %61 = vector.broadcast %cst_11 : f32 to vector<18x18xf32>
    %c0_12 = arith.constant 0 : index
    %c0_13 = arith.constant 0 : index
    %62 = vector.load %arg8[%c0_12, %c0_13] : memref<18x18xf32, #tpu.memory_space<vmem>>, vector<18x18xf32>
    tpu.vector_store %arg8[%c0_12, %c0_13], %61 {strides = array<i32>} : memref<18x18xf32, #tpu.memory_space<vmem>>, vector<18x18xf32>,
    %cst_14 = arith.constant 0.000000e+00 : f32
    %63 = vector.broadcast %cst_14 : f32 to vector<16x16xf32>
    %64 = arith.maximumf %60, %63 : vector<16x16xf32>
    %c1_15 = arith.constant 1 : index
    %c1_16 = arith.constant 1 : index
    %65 = vector.load %arg8[%c1_15, %c1_16] : memref<18x18xf32, #tpu.memory_space<vmem>>, vector<16x16xf32>
    tpu.vector_store %arg8[%c1_15, %c1_16], %64 {strides = array<i32>} : memref<18x18xf32, #tpu.memory_space<vmem>>, vector<16x16xf32>,
    %c0_17 = arith.constant 0 : index
    %c0_18 = arith.constant 0 : index
    %66 = vector.load %arg8[%c0_17, %c0_18] : memref<18x18xf32, #tpu.memory_space<vmem>>, vector<18x18xf32>
    %cst_19 = arith.constant 0.000000e+00 : f32
    %67 = vector.broadcast %cst_19 : f32 to vector<16x16xf32>
    %68 = vector.extract_strided_slice %66 {offsets = [0, 0], sizes = [16, 16], strides = [1, 1]} : vector<18x18xf32> to vector<16x16xf32>
    %69 = arith.index_cast %arg1 : i32 to index
    %c0_20 = arith.constant 0 : index
    %70 = memref.load %arg3[%69, %c0_20] : memref<4x9xf32, #tpu.memory_space<smem>>
    %71 = vector.broadcast %70 : f32 to vector<16x16xf32>
    %72 = arith.mulf %68, %71 : vector<16x16xf32>
    %73 = arith.addf %67, %72 : vector<16x16xf32>
    %74 = vector.extract_strided_slice %66 {offsets = [0, 1], sizes = [16, 16], strides = [1, 1]} : vector<18x18xf32> to vector<16x16xf32>
    %75 = arith.index_cast %arg1 : i32 to index
    %c1_21 = arith.constant 1 : index
    %76 = memref.load %arg3[%75, %c1_21] : memref<4x9xf32, #tpu.memory_space<smem>>
    %77 = vector.broadcast %76 : f32 to vector<16x16xf32>
    %78 = arith.mulf %74, %77 : vector<16x16xf32>
    %79 = arith.addf %73, %78 : vector<16x16xf32>
    %80 = vector.extract_strided_slice %66 {offsets = [0, 2], sizes = [16, 16], strides = [1, 1]} : vector<18x18xf32> to vector<16x16xf32>
    %81 = arith.index_cast %arg1 : i32 to index
    %c2_22 = arith.constant 2 : index
    %82 = memref.load %arg3[%81, %c2_22] : memref<4x9xf32, #tpu.memory_space<smem>>
    %83 = vector.broadcast %82 : f32 to vector<16x16xf32>
    %84 = arith.mulf %80, %83 : vector<16x16xf32>
    %85 = arith.addf %79, %84 : vector<16x16xf32>
    %86 = vector.extract_strided_slice %66 {offsets = [1, 0], sizes = [16, 16], strides = [1, 1]} : vector<18x18xf32> to vector<16x16xf32>
    %87 = arith.index_cast %arg1 : i32 to index
    %c3_23 = arith.constant 3 : index
    %88 = memref.load %arg3[%87, %c3_23] : memref<4x9xf32, #tpu.memory_space<smem>>
    %89 = vector.broadcast %88 : f32 to vector<16x16xf32>
    %90 = arith.mulf %86, %89 : vector<16x16xf32>
    %91 = arith.addf %85, %90 : vector<16x16xf32>
    %92 = vector.extract_strided_slice %66 {offsets = [1, 1], sizes = [16, 16], strides = [1, 1]} : vector<18x18xf32> to vector<16x16xf32>
    %93 = arith.index_cast %arg1 : i32 to index
    %c4_24 = arith.constant 4 : index
    %94 = memref.load %arg3[%93, %c4_24] : memref<4x9xf32, #tpu.memory_space<smem>>
    %95 = vector.broadcast %94 : f32 to vector<16x16xf32>
    %96 = arith.mulf %92, %95 : vector<16x16xf32>
    %97 = arith.addf %91, %96 : vector<16x16xf32>
    %98 = vector.extract_strided_slice %66 {offsets = [1, 2], sizes = [16, 16], strides = [1, 1]} : vector<18x18xf32> to vector<16x16xf32>
    %99 = arith.index_cast %arg1 : i32 to index
    %c5_25 = arith.constant 5 : index
    %100 = memref.load %arg3[%99, %c5_25] : memref<4x9xf32, #tpu.memory_space<smem>>
    %101 = vector.broadcast %100 : f32 to vector<16x16xf32>
    %102 = arith.mulf %98, %101 : vector<16x16xf32>
    %103 = arith.addf %97, %102 : vector<16x16xf32>
    %104 = vector.extract_strided_slice %66 {offsets = [2, 0], sizes = [16, 16], strides = [1, 1]} : vector<18x18xf32> to vector<16x16xf32>
    %105 = arith.index_cast %arg1 : i32 to index
    %c6_26 = arith.constant 6 : index
    %106 = memref.load %arg3[%105, %c6_26] : memref<4x9xf32, #tpu.memory_space<smem>>
    %107 = vector.broadcast %106 : f32 to vector<16x16xf32>
    %108 = arith.mulf %104, %107 : vector<16x16xf32>
    %109 = arith.addf %103, %108 : vector<16x16xf32>
    %110 = vector.extract_strided_slice %66 {offsets = [2, 1], sizes = [16, 16], strides = [1, 1]} : vector<18x18xf32> to vector<16x16xf32>
    %111 = arith.index_cast %arg1 : i32 to index
    %c7_27 = arith.constant 7 : index
    %112 = memref.load %arg3[%111, %c7_27] : memref<4x9xf32, #tpu.memory_space<smem>>
    %113 = vector.broadcast %112 : f32 to vector<16x16xf32>
    %114 = arith.mulf %110, %113 : vector<16x16xf32>
    %115 = arith.addf %109, %114 : vector<16x16xf32>
    %116 = vector.extract_strided_slice %66 {offsets = [2, 2], sizes = [16, 16], strides = [1, 1]} : vector<18x18xf32> to vector<16x16xf32>
    %117 = arith.index_cast %arg1 : i32 to index
    %c8_28 = arith.constant 8 : index
    %118 = memref.load %arg3[%117, %c8_28] : memref<4x9xf32, #tpu.memory_space<smem>>
    %119 = vector.broadcast %118 : f32 to vector<16x16xf32>
    %120 = arith.mulf %116, %119 : vector<16x16xf32>
    %121 = arith.addf %115, %120 : vector<16x16xf32>
    %c0_29 = arith.constant 0 : index
    %c0_30 = arith.constant 0 : index
    %c0_31 = arith.constant 0 : index
    %c0_32 = arith.constant 0 : index
    %122 = vector.load %arg5[%c0_29, %c0_30, %c0_31, %c0_32] : memref<1x1x16x16xf32, #tpu.memory_space<vmem>>, vector<1x1x16x16xf32>
    %123 = vector.shape_cast %122 : vector<1x1x16x16xf32> to vector<16x16xf32>
    %124 = vector.shape_cast %121 : vector<16x16xf32> to vector<1x1x16x16xf32>
    tpu.vector_store %arg5[%c0_29, %c0_30, %c0_31, %c0_32], %124 {strides = array<i32>} : memref<1x1x16x16xf32, #tpu.memory_space<vmem>>, vector<1x1x16x16xf32>,
    %cst_33 = arith.constant dense<0.000000e+00> : vector<16xf32>
    %125 = vector.multi_reduction <add>, %121, %cst_33 [0] : vector<16x16xf32> to vector<16xf32>
    %126 = vector.shape_cast %125 : vector<16xf32> to vector<1x16xf32>
    %c0_34 = arith.constant 0 : index
    %c0_35 = arith.constant 0 : index
    %c0_36 = arith.constant 0 : index
    %c0_37 = arith.constant 0 : index
    %127 = vector.load %arg6[%c0_34, %c0_35, %c0_36, %c0_37] : memref<1x1x2x16xf32, #tpu.memory_space<vmem>>, vector<1x1x1x16xf32>
    %128 = vector.shape_cast %127 : vector<1x1x1x16xf32> to vector<1x16xf32>
    %129 = vector.shape_cast %126 : vector<1x16xf32> to vector<1x1x1x16xf32>
    tpu.vector_store %arg6[%c0_34, %c0_35, %c0_36, %c0_37], %129 {strides = array<i32>} : memref<1x1x2x16xf32, #tpu.memory_space<vmem>>, vector<1x1x1x16xf32>,
    %130 = arith.mulf %121, %121 : vector<16x16xf32>
    %cst_38 = arith.constant dense<0.000000e+00> : vector<16xf32>
    %131 = vector.multi_reduction <add>, %130, %cst_38 [0] : vector<16x16xf32> to vector<16xf32>
    %132 = vector.shape_cast %131 : vector<16xf32> to vector<1x16xf32>
    %c0_39 = arith.constant 0 : index
    %c0_40 = arith.constant 0 : index
    %c1_41 = arith.constant 1 : index
    %c0_42 = arith.constant 0 : index
    %133 = vector.load %arg6[%c0_39, %c0_40, %c1_41, %c0_42] : memref<1x1x2x16xf32, #tpu.memory_space<vmem>>, vector<1x1x1x16xf32>
    %134 = vector.shape_cast %133 : vector<1x1x1x16xf32> to vector<1x16xf32>
    %135 = vector.shape_cast %132 : vector<1x16xf32> to vector<1x1x1x16xf32>
    tpu.vector_store %arg6[%c0_39, %c0_40, %c1_41, %c0_42], %135 {strides = array<i32>} : memref<1x1x2x16xf32, #tpu.memory_space<vmem>>, vector<1x1x1x16xf32>,
    return
  }
  func.func @transform_0(%arg0: i32, %arg1: i32) -> (i32, i32) {
    %c0_i32 = arith.constant 0 : i32
    %c0_i32_0 = arith.constant 0 : i32
    %c0_i32_1 = arith.constant 0 : i32
    return %c0_i32, %c0_i32_0 : i32, i32
  }
  func.func @transform_1(%arg0: i32, %arg1: i32) -> (i32, i32) {
    %c0_i32 = arith.constant 0 : i32
    %c0_i32_0 = arith.constant 0 : i32
    %c0_i32_1 = arith.constant 0 : i32
    return %c0_i32, %c0_i32_0 : i32, i32
  }
  func.func @transform_2(%arg0: i32, %arg1: i32) -> (i32, i32, i32, i32) {
    %c0_i32 = arith.constant 0 : i32
    %c0_i32_0 = arith.constant 0 : i32
    %c0_i32_1 = arith.constant 0 : i32
    return %arg0, %arg1, %c0_i32, %c0_i32_0 : i32, i32, i32, i32
  }
  func.func @transform_3(%arg0: i32, %arg1: i32) -> (i32, i32, i32, i32) {
    %c0_i32 = arith.constant 0 : i32
    %c0_i32_0 = arith.constant 0 : i32
    %c0_i32_1 = arith.constant 0 : i32
    return %arg0, %arg1, %c0_i32, %c0_i32_0 : i32, i32, i32, i32
  }
  func.func @transform_4(%arg0: i32, %arg1: i32) -> (i32, i32, i32, i32) {
    %c0_i32 = arith.constant 0 : i32
    %c0_i32_0 = arith.constant 0 : i32
    %c0_i32_1 = arith.constant 0 : i32
    return %arg0, %arg1, %c0_i32, %c0_i32_0 : i32, i32, i32, i32
  }
}

</mosaic_0001>

<llo_original>
// kernel: tpu_custom_call.1
$region0: #{tpu_custom_call.1}
  #allocation0 [shape = 'u32[]', space=smem, size = 0x4, offset = 0x4, fixed_abs, tag = 'smem constant byte address 0x4 - core index']
  #allocation1 [shape = 'u32[144,128]{1,0:T(1,128)}', space=vmem, size = 0x12000, scoped, tag = 'internal scratch']
  #allocation2 [shape = 'f32[18,18]{1,0:T(8,128)}', space=vmem, size = 0x3000, scoped, tag = 'scratch operand']
  #allocation3 [shape = 'f32[18,18]{1,0:T(8,128)}', space=vmem, size = 0x3000, scoped, tag = 'scratch operand']
  %s0 = inlined_call_operand.hbm [shape: f32[4,9], index: 0, kind: input, shape index: {}]
  %s1 = inlined_call_operand.hbm [shape: f32[4,9], index: 1, kind: input, shape index: {}]
  %s2 = inlined_call_operand.hbm [shape: f32[2,4,16,16], index: 2, kind: input, shape index: {}]
  %s3 = inlined_call_operand.hbm [shape: f32[2,4,16,16], index: 3, kind: output, shape index: {0}]
  %s4 = inlined_call_operand.hbm [shape: f32[2,4,2,16], index: 4, kind: output, shape index: {1}]
  %5 = xla_tuple %s3, %s4
  %s6 = sld [smem:[#allocation0]]
  $region65: #{tpu_custom_call.1} parent=0
    _
  %s8 = ssub.s32 1, %s6
  %s9 = scalar_select 0, %s8, %s6
  $region1: #{tpu_custom_call.1} parent=0
    #allocation4 [shape = 'u8[2048]{0}', space=smem, size = 0x800, scoped, tag = 'input window, operand 0, single buffered']
    #allocation5 [shape = 's32[2]{0}', space=sflag, size = 0x8, scoped, tag = 'scoped memory for tpu_custom_call.1']
    #allocation6 [shape = 's32[2]{0}', space=sflag, size = 0x8, scoped, tag = 'scoped memory for tpu_custom_call.1']
    #allocation7 [shape = 's32[2]{0}', space=sflag, size = 0x8, scoped, tag = 'scoped memory for tpu_custom_call.1']
    #allocation8 [shape = 'u8[2048]{0}', space=smem, size = 0x800, scoped, tag = 'input window, operand 1, single buffered']
    #allocation9 [shape = 's32[1]{0}', space=sflag, size = 0x4, scoped, tag = 'scoped memory for tpu_custom_call.1']
    #allocation10 [shape = 'u8[16384]{0}', space=vmem, size = 0x4000, scoped, tag = 'input window, operand 2']
    #allocation11 [shape = 'u8[16384]{0}', space=vmem, size = 0x4000, scoped, tag = 'output window, operand 0']
    #allocation12 [shape = 'u8[2048]{0}', space=vmem, size = 0x800, scoped, tag = 'output window, operand 1']
    #allocation13 [shape = 's32[2]{0}', space=sflag, size = 0x8, scoped, tag = 'scoped memory for tpu_custom_call.1']
    %10 = vsyncpa [#allocation7], 0
    %11 = vsyncpa [#allocation9], 0
    %12 = vsyncpa [#allocation5], 0
    %s13 = scalar_lea.sflag [#allocation5], 1
    %14 = vsyncpa %s13, 0
    %15 = vsyncpa [#allocation6], 0
    %s16 = scalar_lea.sflag [#allocation6], 1
    %17 = vsyncpa %s16, 0
    %18 = vsyncpa [#allocation13], 0
    %s19 = scalar_lea.sflag [#allocation13], 1
    %20 = vsyncpa %s19, 0
    loop: start=0, step=1, limit=10
    $region2: #{tpu_custom_call.1} parent=1 // loop_pre_header
      _
    $region3: #{tpu_custom_call.1} parent=1 // loop_header
      %s22 = sphi 0, %s26
      %p23 = scmp.ge.s32.totalorder %s22, 10
      %s29 = sphi 0, %s41
      %s30 = sphi 0, %s37
      %s31 = sphi 0, %s29
      %s32 = sphi 0, %s30
      %s33 = sphi 0, %s31
      %s34 = sphi 0, %s32
      %s42 = sphi 0, %s42
      %s44 = sphi 0, %s42
      %s45 = sphi 0, %s44
      %s59 = sphi 0, %s45
      %s63 = sphi 0, %s63
      %s65 = sphi 0, %s63
      %s66 = sphi 0, %s65
      %s80 = sphi 0, %s66
      %s88 = sphi 0, %s90
      %s91 = sphi 0, %s88
      %s92 = sphi 0, %s91
      %s108 = sphi 0, %s92
      %s116 = sphi 0, %s118
      %s119 = sphi 0, %s116
      %s120 = sphi 0, %s119
      %s136 = sphi 0, %s120
      %s144 = sphi 0, %s146
      %s147 = sphi 0, %s144
      %s148 = sphi 0, %s147
      %s164 = sphi 0, %s148
    $region4: #{tpu_custom_call.1} parent=1 // loop_header_branch
      %25 = sbr.rel (%p23) target = $region8
    $region5: #{tpu_custom_call.1} parent=1 // loop_body
      %s27 = ssub.s32 %s22, 1
      %s28 = ssub.s32 %s22, 2
      %s35 = sadd.s32 1, %s30
      %p36 = scmp.ge.s32.totalorder %s35, 4
      %s37 = scalar_select %p36, 0, %s35
      %s38 = sadd.s32 1, %s29
      %s39 = scalar_select %p36, %s38, %s29
      %p40 = scmp.ge.s32.totalorder %s39, 2
      %s41 = scalar_select %p40, 0, %s39
      %s43 = sadd.s32 %s42, 1
      %p46 = scmp.eq.s32.totalorder %s22, 7
      %p47 = scmp.ne.s32.totalorder %s42, %s44
      %p48 = scmp.eq.s32.totalorder %s22, 0
      %p49 = por %p47, %p48
      %p50 = scmp.ne.s32.totalorder %s42, %s44
      %p51 = scmp.eq.s32.totalorder %s27, 7
      %p52 = por %p50, %p51
      %p53 = scmp.ne.s32.totalorder %s44, %s45
      %p54 = scmp.eq.s32.totalorder %s27, 0
      %p55 = por %p53, %p54
      %p56 = scmp.ne.s32.totalorder %s44, %s45
      %p57 = scmp.eq.s32.totalorder %s28, 7
      %p58 = por %p56, %p57
      %p60 = scmp.ne.s32.totalorder %s45, %s59
      %p61 = scmp.eq.s32.totalorder %s28, 0
      %p62 = por %p60, %p61
      %s64 = sadd.s32 %s63, 1
      %p67 = scmp.eq.s32.totalorder %s22, 7
      %p68 = scmp.ne.s32.totalorder %s63, %s65
      %p69 = scmp.eq.s32.totalorder %s22, 0
      %p70 = por %p68, %p69
      %p71 = scmp.ne.s32.totalorder %s63, %s65
      %p72 = scmp.eq.s32.totalorder %s27, 7
      %p73 = por %p71, %p72
      %p74 = scmp.ne.s32.totalorder %s65, %s66
      %p75 = scmp.eq.s32.totalorder %s27, 0
      %p76 = por %p74, %p75
      %p77 = scmp.ne.s32.totalorder %s65, %s66
      %p78 = scmp.eq.s32.totalorder %s28, 7
      %p79 = por %p77, %p78
      %p81 = scmp.ne.s32.totalorder %s66, %s80
      %p82 = scmp.eq.s32.totalorder %s28, 0
      %p83 = por %p81, %p82
      %s84 = ssub.s32 %s29, %s41
      %s85 = ssub.s32 %s30, %s37
      %s86 = sor.u32 %s84, %s85
      %p87 = scmp.eq.s32.totalorder %s86, 0
      %s89 = sadd.s32 %s88, 1
      %s90 = scalar_select %p87, %s88, %s89
      %p93 = pneg %p87
      %p94 = scmp.eq.s32.totalorder %s22, 7
      %p95 = por %p93, %p94
      %p96 = scmp.ne.s32.totalorder %s88, %s91
      %p97 = scmp.eq.s32.totalorder %s22, 0
      %p98 = por %p96, %p97
      %p99 = scmp.ne.s32.totalorder %s88, %s91
      %p100 = scmp.eq.s32.totalorder %s27, 7
      %p101 = por %p99, %p100
      %p102 = scmp.ne.s32.totalorder %s91, %s92
      %p103 = scmp.eq.s32.totalorder %s27, 0
      %p104 = por %p102, %p103
      %p105 = scmp.ne.s32.totalorder %s91, %s92
      %p106 = scmp.eq.s32.totalorder %s28, 7
      %p107 = por %p105, %p106
      %p109 = scmp.ne.s32.totalorder %s92, %s108
      %p110 = scmp.eq.s32.totalorder %s28, 0
      %p111 = por %p109, %p110
      %s112 = ssub.s32 %s29, %s41
      %s113 = ssub.s32 %s30, %s37
      %s114 = sor.u32 %s112, %s113
      %p115 = scmp.eq.s32.totalorder %s114, 0
      %s117 = sadd.s32 %s116, 1
      %s118 = scalar_select %p115, %s116, %s117
      %p121 = pneg %p115
      %p122 = scmp.eq.s32.totalorder %s22, 7
      %p123 = por %p121, %p122
      %p124 = scmp.ne.s32.totalorder %s116, %s119
      %p125 = scmp.eq.s32.totalorder %s22, 0
      %p126 = por %p124, %p125
      %p127 = scmp.ne.s32.totalorder %s116, %s119
      %p128 = scmp.eq.s32.totalorder %s27, 7
      %p129 = por %p127, %p128
      %p130 = scmp.ne.s32.totalorder %s119, %s120
      %p131 = scmp.eq.s32.totalorder %s27, 0
      %p132 = por %p130, %p131
      %p133 = scmp.ne.s32.totalorder %s119, %s120
      %p134 = scmp.eq.s32.totalorder %s28, 7
      %p135 = por %p133, %p134
      %p137 = scmp.ne.s32.totalorder %s120, %s136
      %p138 = scmp.eq.s32.totalorder %s28, 0
      %p139 = por %p137, %p138
      %s140 = ssub.s32 %s29, %s41
      %s141 = ssub.s32 %s30, %s37
      %s142 = sor.u32 %s140, %s141
      %p143 = scmp.eq.s32.totalorder %s142, 0
      %s145 = sadd.s32 %s144, 1
      %s146 = scalar_select %p143, %s144, %s145
      %p149 = pneg %p143
      %p150 = scmp.eq.s32.totalorder %s22, 7
      %p151 = por %p149, %p150
      %p152 = scmp.ne.s32.totalorder %s144, %s147
      %p153 = scmp.eq.s32.totalorder %s22, 0
      %p154 = por %p152, %p153
      %p155 = scmp.ne.s32.totalorder %s144, %s147
      %p156 = scmp.eq.s32.totalorder %s27, 7
      %p157 = por %p155, %p156
      %p158 = scmp.ne.s32.totalorder %s147, %s148
      %p159 = scmp.eq.s32.totalorder %s27, 0
      %p160 = por %p158, %p159
      %p161 = scmp.ne.s32.totalorder %s147, %s148
      %p162 = scmp.eq.s32.totalorder %s28, 7
      %p163 = por %p161, %p162
      %p165 = scmp.ne.s32.totalorder %s148, %s164
      %p166 = scmp.eq.s32.totalorder %s28, 0
      %p167 = por %p165, %p166
      %p168 = scmp.le.s32.totalorder 1, %s22
      %p169 = scmp.lt.s32.totalorder %s22, 9
      %p170 = pnand %p168, %p169
      %p171 = pneg %p170
      // Predicated region
      $region9: #{tpu_custom_call.1} parent=5 // pred_check
        _
      $region10: #{tpu_custom_call.1} parent=5 // pred_check_branch
        %173 = sbr.rel (%p170) target = $region12
      $region11: #{tpu_custom_call.1} parent=5 // pred_region
        %s174 = ssub.s32 %s22, 1
        // Predicated region
        $region13: #{tpu_custom_call.1} parent=11 // pred_check
          %p175 = pneg %p55
        $region14: #{tpu_custom_call.1} parent=11 // pred_check_branch
          %177 = sbr.rel (%p175) target = $region16
        $region15: #{tpu_custom_call.1} parent=11 // pred_region
          %s179 = ssub.s32 64, 64
          %180 = vsyncadd [#allocation7], %s179
          %183 = dma.hbm_to_smem %s0, 64, [#allocation4], [#allocation7]
        $region16: #{tpu_custom_call.1} parent=11 // pred_fallthru
          _
        // Predicated region
        $region17: #{tpu_custom_call.1} parent=11 // pred_check
          %p184 = pneg %p76
        $region18: #{tpu_custom_call.1} parent=11 // pred_check_branch
          %186 = sbr.rel (%p184) target = $region20
        $region19: #{tpu_custom_call.1} parent=11 // pred_region
          %s188 = ssub.s32 64, 64
          %189 = vsyncadd [#allocation9], %s188
          %192 = dma.hbm_to_smem %s1, 64, [#allocation8], [#allocation9]
        $region20: #{tpu_custom_call.1} parent=11 // pred_fallthru
          _
      $region12: #{tpu_custom_call.1} parent=5 // pred_fallthru
        _
      %p193 = scmp.lt.s32.totalorder %s22, 8
      // Predicated region
      $region21: #{tpu_custom_call.1} parent=5 // pred_check
        %p194 = pneg %p193
      $region22: #{tpu_custom_call.1} parent=5 // pred_check_branch
        %196 = sbr.rel (%p194) target = $region24
      $region23: #{tpu_custom_call.1} parent=5 // pred_region
        // Predicated region
        $region25: #{tpu_custom_call.1} parent=23 // pred_check
          %p197 = pneg %p98
        $region26: #{tpu_custom_call.1} parent=23 // pred_check_branch
          %199 = sbr.rel (%p197) target = $region28
        $region27: #{tpu_custom_call.1} parent=23 // pred_region
          %s200 = sand.u32 %s88, 1
          %s201 = scalar_lea.sflag [#allocation5], %s200
          %s202 = sand.u32 %s88, 1
          %s203 = smul.addr %s202, 16
          %s204 = scalar_lea.vmem [#allocation10], %s203
          %s206 = ssub.s32 256, 256
          %207 = vsyncadd %s201, %s206
          %s208 = smul.addr %s30, 2
          %s209 = smul.addr %s29, 8
          %s210 = sadd.s32 %s208, %s209
          %s211 = smul.addr %s210, 128
          %s212 = scalar_lea.hbm %s2, %s211
          %s213 = sshll.u32 %s204, 4
          %s214 = int_to_ptr.vmem [resolvable:$true] %s213
          %219 = dma.hbm_to_vmem [thread:$0]  %s212, 256, %s214, %s201, 128, 128, 8
        $region28: #{tpu_custom_call.1} parent=23 // pred_fallthru
          _
      $region24: #{tpu_custom_call.1} parent=5 // pred_fallthru
        _
      %p220 = scmp.le.s32.totalorder 1, %s22
      %p221 = scmp.lt.s32.totalorder %s22, 9
      %p222 = pnand %p220, %p221
      %p223 = pneg %p222
      // Predicated region
      $region29: #{tpu_custom_call.1} parent=5 // pred_check
        _
      $region30: #{tpu_custom_call.1} parent=5 // pred_check_branch
        %225 = sbr.rel (%p222) target = $region32
      $region31: #{tpu_custom_call.1} parent=5 // pred_region
        %s226 = ssub.s32 %s22, 1
        // Predicated region
        $region33: #{tpu_custom_call.1} parent=31 // pred_check
          %p227 = pneg %p55
        $region34: #{tpu_custom_call.1} parent=31 // pred_check_branch
          %229 = sbr.rel (%p227) target = $region36
        $region35: #{tpu_custom_call.1} parent=31 // pred_region
          %230 = dma.done [#allocation7], 64
        $region36: #{tpu_custom_call.1} parent=31 // pred_fallthru
          _
        // Predicated region
        $region37: #{tpu_custom_call.1} parent=31 // pred_check
          %p231 = pneg %p76
        $region38: #{tpu_custom_call.1} parent=31 // pred_check_branch
          %233 = sbr.rel (%p231) target = $region40
        $region39: #{tpu_custom_call.1} parent=31 // pred_region
          %234 = dma.done [#allocation9], 64
        $region40: #{tpu_custom_call.1} parent=31 // pred_fallthru
          _
        %s235 = sand.u32 %s91, 1
        %s236 = scalar_lea.sflag [#allocation5], %s235
        %s237 = sand.u32 %s91, 1
        %s238 = smul.addr %s237, 16
        %s239 = scalar_lea.vmem [#allocation10], %s238
        // Predicated region
        $region41: #{tpu_custom_call.1} parent=31 // pred_check
          %p240 = pneg %p104
        $region42: #{tpu_custom_call.1} parent=31 // pred_check_branch
          %242 = sbr.rel (%p240) target = $region44
        $region43: #{tpu_custom_call.1} parent=31 // pred_region
          %243 = dma.done %s236, 256
        $region44: #{tpu_custom_call.1} parent=31 // pred_fallthru
          _
        %244 = sfence
        %p245 = pneg %p55
        %p246 = pneg %p52
        %p247 = pneg %p76
        %p248 = pneg %p73
        %s249 = sand.u32 %s91, 1
        %s250 = scalar_lea.sflag [#allocation5], %s249
        %s251 = sand.u32 %s91, 1
        %s252 = smul.addr %s251, 16
        %s253 = scalar_lea.vmem [#allocation10], %s252
        %p254 = pneg %p104
        %p255 = pneg %p101
        %p256 = pneg %p132
        %p257 = pneg %p129
        %s258 = sand.u32 %s119, 1
        %s259 = scalar_lea.sflag [#allocation6], %s258
        %s260 = sand.u32 %s119, 1
        %s261 = smul.addr %s260, 16
        %s262 = scalar_lea.vmem [#allocation11], %s261
        %p263 = pneg %p160
        %p264 = pneg %p157
        %s265 = sand.u32 %s147, 1
        %s266 = scalar_lea.sflag [#allocation13], %s265
        %s267 = sand.u32 %s147, 1
        %s268 = smul.addr %s267, 2
        %s269 = scalar_lea.vmem [#allocation12], %s268
        %vm270 = vcmask 146432
        %271 = vst.msk [vmem:[#allocation2] sm:$0xff] %vm270, 0.0
        %272 = vst.msk [vmem:[#allocation2 + $0x8] sm:$0xff] %vm270, 0.0
        %vm273 = vcmask 140288
        %274 = vst.msk [vmem:[#allocation2 + $0x10] sm:$0x3] %vm273, 0.0
        %v275 = vld [vmem:[%s239] sm:$0xff]
        %v276 = vld [vmem:[%s239 + $0x8] sm:$0xff]
        %279 = vrot.lane.b32.xlu0 %v275, 1
        %v280 = vpop.permute.xlu0 %279
        %281 = vrot.lane.b32.xlu0 %v276, 1
        %v282 = vpop.permute.xlu0 %281
        %vm285 = vcmask 138248
        %286 = vst.msk [vmem:[#allocation2 + $0x1] sm:$0xff] %vm285, %v280
        %287 = vst.msk [vmem:[#allocation2 + $0x9] sm:$0xff] %vm285, %v282
        %v288 = vld [vmem:[#allocation2] sm:$0xff]
        %v289 = vld [vmem:[#allocation2 + $0x8] sm:$0xff]
        %v290 = vld [vmem:[#allocation2 + $0x10] sm:$0x3]
        %s291 = smul.u32 %s32, 128
        %s292 = sld [smem:[#allocation4 + %s291]]
        %v293 = vstv %s292
        %v294 = vmul.f32 %v288, %v293
        %v295 = vmul.f32 %v289, %v293
        %v296 = vadd.f32 %v294, 0.0
        %v297 = vadd.f32 %v295, 0.0
        %s298 = sadd.s32 %s291, 1
        %s299 = sld [smem:[#allocation4 + %s298]]
        %v300 = vstv %s299
        %v301 = vmul.f32 %v288, %v300
        %v302 = vmul.f32 %v289, %v300
        %305 = vrot.lane.b32.xlu0 %v301, 127
        %v306 = vpop.permute.xlu0 %305
        %307 = vrot.lane.b32.xlu0 %v302, 127
        %v308 = vpop.permute.xlu0 %307
        %v311 = vadd.f32 %v296, %v306
        %v312 = vadd.f32 %v297, %v308
        %s313 = sadd.s32 %s291, 2
        %s314 = sld [smem:[#allocation4 + %s313]]
        %v315 = vstv %s314
        %v316 = vmul.f32 %v288, %v315
        %v317 = vmul.f32 %v289, %v315
        %320 = vrot.lane.b32.xlu0 %v316, 126
        %v321 = vpop.permute.xlu0 %320
        %322 = vrot.lane.b32.xlu0 %v317, 126
        %v323 = vpop.permute.xlu0 %322
        %v326 = vadd.f32 %v311, %v321
        %v327 = vadd.f32 %v312, %v323
        %s328 = sadd.s32 %s291, 3
        %s329 = sld [smem:[#allocation4 + %s328]]
        %v330 = vstv %s329
        %v331 = vmul.f32 %v288, %v330
        %v332 = vmul.f32 %v289, %v330
        %v333 = vmul.f32 %v290, %v330
        %vm337 = vcmask 1046528
        %v338 = vrot.slane %v331, 1
        %v339 = vrot.slane %v332, 1
        %v340 = vsel %vm337, %v338, %v339
        %v341 = vrot.slane %v333, 1
        %v342 = vsel %vm337, %v339, %v341
        %v345 = vadd.f32 %v326, %v340
        %v346 = vadd.f32 %v327, %v342
        %s347 = sadd.s32 %s291, 4
        %s348 = sld [smem:[#allocation4 + %s347]]
        %v349 = vstv %s348
        %v350 = vmul.f32 %v288, %v349
        %v351 = vmul.f32 %v289, %v349
        %v352 = vmul.f32 %v290, %v349
        %v356 = vrot.slane %v350, 1
        %v357 = vrot.slane %v351, 1
        %v358 = vsel %vm337, %v356, %v357
        %v359 = vrot.slane %v352, 1
        %v360 = vsel %vm337, %v357, %v359
        %361 = vrot.lane.b32.xlu0 %v358, 127
        %v362 = vpop.permute.xlu0 %361
        %363 = vrot.lane.b32.xlu0 %v360, 127
        %v364 = vpop.permute.xlu0 %363
        %v367 = vadd.f32 %v345, %v362
        %v368 = vadd.f32 %v346, %v364
        %s369 = sadd.s32 %s291, 5
        %s370 = sld [smem:[#allocation4 + %s369]]
        %v371 = vstv %s370
        %v372 = vmul.f32 %v288, %v371
        %v373 = vmul.f32 %v289, %v371
        %v374 = vmul.f32 %v290, %v371
        %v378 = vrot.slane %v372, 1
        %v379 = vrot.slane %v373, 1
        %v380 = vsel %vm337, %v378, %v379
        %v381 = vrot.slane %v374, 1
        %v382 = vsel %vm337, %v379, %v381
        %383 = vrot.lane.b32.xlu0 %v380, 126
        %v384 = vpop.permute.xlu0 %383
        %385 = vrot.lane.b32.xlu0 %v382, 126
        %v386 = vpop.permute.xlu0 %385
        %v389 = vadd.f32 %v367, %v384
        %v390 = vadd.f32 %v368, %v386
        %s391 = sadd.s32 %s291, 6
        %s392 = sld [smem:[#allocation4 + %s391]]
        %v393 = vstv %s392
        %v394 = vmul.f32 %v288, %v393
        %v395 = vmul.f32 %v289, %v393
        %v396 = vmul.f32 %v290, %v393
        %vm400 = vcmask 1045504
        %v401 = vrot.slane %v394, 2
        %v402 = vrot.slane %v395, 2
        %v403 = vsel %vm400, %v401, %v402
        %v404 = vrot.slane %v396, 2
        %v405 = vsel %vm400, %v402, %v404
        %v408 = vadd.f32 %v389, %v403
        %v409 = vadd.f32 %v390, %v405
        %s410 = sadd.s32 %s291, 7
        %s411 = sld [smem:[#allocation4 + %s410]]
        %v412 = vstv %s411
        %v413 = vmul.f32 %v288, %v412
        %v414 = vmul.f32 %v289, %v412
        %v415 = vmul.f32 %v290, %v412
        %v419 = vrot.slane %v413, 2
        %v420 = vrot.slane %v414, 2
        %v421 = vsel %vm400, %v419, %v420
        %v422 = vrot.slane %v415, 2
        %v423 = vsel %vm400, %v420, %v422
        %424 = vrot.lane.b32.xlu0 %v421, 127
        %v425 = vpop.permute.xlu0 %424
        %426 = vrot.lane.b32.xlu0 %v423, 127
        %v427 = vpop.permute.xlu0 %426
        %v430 = vadd.f32 %v408, %v425
        %v431 = vadd.f32 %v409, %v427
        %s432 = sadd.s32 %s291, 8
        %s433 = sld [smem:[#allocation4 + %s432]]
        %v434 = vstv %s433
        %v435 = vmul.f32 %v288, %v434
        %v436 = vmul.f32 %v289, %v434
        %v437 = vmul.f32 %v290, %v434
        %v441 = vrot.slane %v435, 2
        %v442 = vrot.slane %v436, 2
        %v443 = vsel %vm400, %v441, %v442
        %v444 = vrot.slane %v437, 2
        %v445 = vsel %vm400, %v442, %v444
        %446 = vrot.lane.b32.xlu0 %v443, 126
        %v447 = vpop.permute.xlu0 %446
        %448 = vrot.lane.b32.xlu0 %v445, 126
        %v449 = vpop.permute.xlu0 %448
        %v452 = vadd.f32 %v430, %v447
        %v453 = vadd.f32 %v431, %v449
        %454 = vst.msk [vmem:[#allocation3] sm:$0xff] %vm270, 0.0
        %455 = vst.msk [vmem:[#allocation3 + $0x8] sm:$0xff] %vm270, 0.0
        %456 = vst.msk [vmem:[#allocation3 + $0x10] sm:$0x3] %vm273, 0.0
        %v457 = vmax.f32 %v452, 0.0
        %v458 = vmax.f32 %v453, 0.0
        %461 = vrot.lane.b32.xlu0 %v457, 1
        %v462 = vpop.permute.xlu0 %461
        %463 = vrot.lane.b32.xlu0 %v458, 1
        %v464 = vpop.permute.xlu0 %463
        %467 = vst.msk [vmem:[#allocation3 + $0x1] sm:$0xff] %vm285, %v462
        %468 = vst.msk [vmem:[#allocation3 + $0x9] sm:$0xff] %vm285, %v464
        %v469 = vld [vmem:[#allocation3] sm:$0xff]
        %v470 = vld [vmem:[#allocation3 + $0x8] sm:$0xff]
        %v471 = vld [vmem:[#allocation3 + $0x10] sm:$0x3]
        %s472 = sld [smem:[#allocation8 + %s291]]
        %v473 = vstv %s472
        %v474 = vmul.f32 %v469, %v473
        %v475 = vmul.f32 %v470, %v473
        %v476 = vadd.f32 %v474, 0.0
        %v477 = vadd.f32 %v475, 0.0
        %s478 = sld [smem:[#allocation8 + %s298]]
        %v479 = vstv %s478
        %v480 = vmul.f32 %v469, %v479
        %v481 = vmul.f32 %v470, %v479
        %484 = vrot.lane.b32.xlu0 %v480, 127
        %v485 = vpop.permute.xlu0 %484
        %486 = vrot.lane.b32.xlu0 %v481, 127
        %v487 = vpop.permute.xlu0 %486
        %v490 = vadd.f32 %v476, %v485
        %v491 = vadd.f32 %v477, %v487
        %s492 = sld [smem:[#allocation8 + %s313]]
        %v493 = vstv %s492
        %v494 = vmul.f32 %v469, %v493
        %v495 = vmul.f32 %v470, %v493
        %498 = vrot.lane.b32.xlu0 %v494, 126
        %v499 = vpop.permute.xlu0 %498
        %500 = vrot.lane.b32.xlu0 %v495, 126
        %v501 = vpop.permute.xlu0 %500
        %v504 = vadd.f32 %v490, %v499
        %v505 = vadd.f32 %v491, %v501
        %s506 = sld [smem:[#allocation8 + %s328]]
        %v507 = vstv %s506
        %v508 = vmul.f32 %v469, %v507
        %v509 = vmul.f32 %v470, %v507
        %v510 = vmul.f32 %v471, %v507
        %v514 = vrot.slane %v508, 1
        %v515 = vrot.slane %v509, 1
        %v516 = vsel %vm337, %v514, %v515
        %v517 = vrot.slane %v510, 1
        %v518 = vsel %vm337, %v515, %v517
        %v521 = vadd.f32 %v504, %v516
        %v522 = vadd.f32 %v505, %v518
        %s523 = sld [smem:[#allocation8 + %s347]]
        %v524 = vstv %s523
        %v525 = vmul.f32 %v469, %v524
        %v526 = vmul.f32 %v470, %v524
        %v527 = vmul.f32 %v471, %v524
        %v531 = vrot.slane %v525, 1
        %v532 = vrot.slane %v526, 1
        %v533 = vsel %vm337, %v531, %v532
        %v534 = vrot.slane %v527, 1
        %v535 = vsel %vm337, %v532, %v534
        %536 = vrot.lane.b32.xlu0 %v533, 127
        %v537 = vpop.permute.xlu0 %536
        %538 = vrot.lane.b32.xlu0 %v535, 127
        %v539 = vpop.permute.xlu0 %538
        %v542 = vadd.f32 %v521, %v537
        %v543 = vadd.f32 %v522, %v539
        %s544 = sld [smem:[#allocation8 + %s369]]
        %v545 = vstv %s544
        %v546 = vmul.f32 %v469, %v545
        %v547 = vmul.f32 %v470, %v545
        %v548 = vmul.f32 %v471, %v545
        %v552 = vrot.slane %v546, 1
        %v553 = vrot.slane %v547, 1
        %v554 = vsel %vm337, %v552, %v553
        %v555 = vrot.slane %v548, 1
        %v556 = vsel %vm337, %v553, %v555
        %557 = vrot.lane.b32.xlu0 %v554, 126
        %v558 = vpop.permute.xlu0 %557
        %559 = vrot.lane.b32.xlu0 %v556, 126
        %v560 = vpop.permute.xlu0 %559
        %v563 = vadd.f32 %v542, %v558
        %v564 = vadd.f32 %v543, %v560
        %s565 = sld [smem:[#allocation8 + %s391]]
        %v566 = vstv %s565
        %v567 = vmul.f32 %v469, %v566
        %v568 = vmul.f32 %v470, %v566
        %v569 = vmul.f32 %v471, %v566
        %v573 = vrot.slane %v567, 2
        %v574 = vrot.slane %v568, 2
        %v575 = vsel %vm400, %v573, %v574
        %v576 = vrot.slane %v569, 2
        %v577 = vsel %vm400, %v574, %v576
        %v580 = vadd.f32 %v563, %v575
        %v581 = vadd.f32 %v564, %v577
        %s582 = sld [smem:[#allocation8 + %s410]]
        %v583 = vstv %s582
        %v584 = vmul.f32 %v469, %v583
        %v585 = vmul.f32 %v470, %v583
        %v586 = vmul.f32 %v471, %v583
        %v590 = vrot.slane %v584, 2
        %v591 = vrot.slane %v585, 2
        %v592 = vsel %vm400, %v590, %v591
        %v593 = vrot.slane %v586, 2
        %v594 = vsel %vm400, %v591, %v593
        %595 = vrot.lane.b32.xlu0 %v592, 127
        %v596 = vpop.permute.xlu0 %595
        %597 = vrot.lane.b32.xlu0 %v594, 127
        %v598 = vpop.permute.xlu0 %597
        %v601 = vadd.f32 %v580, %v596
        %v602 = vadd.f32 %v581, %v598
        %s603 = sld [smem:[#allocation8 + %s432]]
        %v604 = vstv %s603
        %v605 = vmul.f32 %v469, %v604
        %v606 = vmul.f32 %v470, %v604
        %v607 = vmul.f32 %v471, %v604
        %v611 = vrot.slane %v605, 2
        %v612 = vrot.slane %v606, 2
        %v613 = vsel %vm400, %v611, %v612
        %v614 = vrot.slane %v607, 2
        %v615 = vsel %vm400, %v612, %v614
        %616 = vrot.lane.b32.xlu0 %v613, 126
        %v617 = vpop.permute.xlu0 %616
        %618 = vrot.lane.b32.xlu0 %v615, 126
        %v619 = vpop.permute.xlu0 %618
        %v622 = vadd.f32 %v601, %v617
        %v623 = vadd.f32 %v602, %v619
        %vm624 = vcmask 130048
        %625 = vst.msk [vmem:[%s262] sm:$0xff] %vm624, %v622
        %626 = vst.msk [vmem:[%s262 + $0x8] sm:$0xff] %vm624, %v623
        %v627 = vsel %vm624, %v622, 0.0
        %v628 = vsel %vm624, %v623, 0.0
        %v629 = vadd.f32 %v627, %v628
        %v630 = vrot.slane %v629, 4
        %v631 = vadd.f32 %v629, %v630
        %v632 = vrot.slane %v631, 2
        %v633 = vadd.f32 %v631, %v632
        %v634 = vrot.slane %v633, 1
        %v635 = vadd.f32 %v633, %v634
        %vm636 = vcmask 122880
        %637 = vst.msk [vmem:[%s269] sm:$0x1] %vm636, %v635
        %v638 = vmul.f32 %v622, %v622
        %v639 = vmul.f32 %v623, %v623
        %v640 = vsel %vm624, %v638, 0.0
        %v641 = vsel %vm624, %v639, 0.0
        %v642 = vadd.f32 %v640, %v641
        %v643 = vrot.slane %v642, 4
        %v644 = vadd.f32 %v642, %v643
        %v645 = vrot.slane %v644, 2
        %v646 = vadd.f32 %v644, %v645
        %v647 = vrot.slane %v646, 1
        %v648 = vadd.f32 %v646, %v647
        %649 = vst.msk [vmem:[%s269 + $0x1] sm:$0x1] %vm636, %v648
        %s650 = sand.u32 %s119, 1
        %s651 = scalar_lea.sflag [#allocation6], %s650
        %s652 = sand.u32 %s119, 1
        %s653 = smul.addr %s652, 16
        %s654 = scalar_lea.vmem [#allocation11], %s653
        %s655 = sand.u32 %s147, 1
        %s656 = scalar_lea.sflag [#allocation13], %s655
        %s657 = sand.u32 %s147, 1
        %s658 = smul.addr %s657, 2
        %s659 = scalar_lea.vmem [#allocation12], %s658
        // Predicated region
        $region45: #{tpu_custom_call.1} parent=31 // pred_check
          %p660 = pneg %p129
        $region46: #{tpu_custom_call.1} parent=31 // pred_check_branch
          %662 = sbr.rel (%p660) target = $region48
        $region47: #{tpu_custom_call.1} parent=31 // pred_region
          %s664 = ssub.s32 256, 256
          %665 = vsyncadd %s651, %s664
          %s666 = smul.addr %s32, 2
          %s667 = smul.addr %s31, 8
          %s668 = sadd.s32 %s666, %s667
          %s669 = smul.addr %s668, 128
          %s670 = scalar_lea.hbm %s3, %s669
          %s671 = sshll.u32 %s654, 4
          %s672 = int_to_ptr.vmem [resolvable:$true] %s671
          %677 = dma.vmem_to_hbm [thread:$0]  %s672, 256, %s670, %s651, 128, 128, 8
        $region48: #{tpu_custom_call.1} parent=31 // pred_fallthru
          _
        // Predicated region
        $region49: #{tpu_custom_call.1} parent=31 // pred_check
          %p678 = pneg %p157
        $region50: #{tpu_custom_call.1} parent=31 // pred_check_branch
          %680 = sbr.rel (%p678) target = $region52
        $region51: #{tpu_custom_call.1} parent=31 // pred_region
          %s682 = ssub.s32 32, 32
          %683 = vsyncadd %s656, %s682
          %s684 = smul.addr %s31, 4
          %s685 = sadd.s32 %s32, %s684
          %s686 = smul.addr %s685, 32
          %s687 = scalar_lea.hbm %s4, %s686
          %s689 = sshll.u32 %s659, 4
          %s690 = int_to_ptr.vmem [resolvable:$true] %s689
          %692 = dma.vmem_to_hbm [thread:$0]  %s690, 32, %s687, %s656
        $region52: #{tpu_custom_call.1} parent=31 // pred_fallthru
          _
      $region32: #{tpu_custom_call.1} parent=5 // pred_fallthru
        _
      %p693 = scmp.le.s32.totalorder 2, %s22
      // Predicated region
      $region53: #{tpu_custom_call.1} parent=5 // pred_check
        %p694 = pneg %p693
      $region54: #{tpu_custom_call.1} parent=5 // pred_check_branch
        %696 = sbr.rel (%p694) target = $region56
      $region55: #{tpu_custom_call.1} parent=5 // pred_region
        %s697 = ssub.s32 %s22, 2
        // Predicated region
        $region57: #{tpu_custom_call.1} parent=55 // pred_check
          %p698 = pneg %p135
        $region58: #{tpu_custom_call.1} parent=55 // pred_check_branch
          %700 = sbr.rel (%p698) target = $region60
        $region59: #{tpu_custom_call.1} parent=55 // pred_region
          %s701 = sand.u32 %s120, 1
          %s702 = scalar_lea.sflag [#allocation6], %s701
          %s703 = sand.u32 %s120, 1
          %s704 = smul.addr %s703, 16
          %s705 = scalar_lea.vmem [#allocation11], %s704
          %706 = dma.done %s702, 256
        $region60: #{tpu_custom_call.1} parent=55 // pred_fallthru
          _
        // Predicated region
        $region61: #{tpu_custom_call.1} parent=55 // pred_check
          %p707 = pneg %p163
        $region62: #{tpu_custom_call.1} parent=55 // pred_check_branch
          %709 = sbr.rel (%p707) target = $region64
        $region63: #{tpu_custom_call.1} parent=55 // pred_region
          %s710 = sand.u32 %s148, 1
          %s711 = scalar_lea.sflag [#allocation13], %s710
          %s712 = sand.u32 %s148, 1
          %s713 = smul.addr %s712, 2
          %s714 = scalar_lea.vmem [#allocation12], %s713
          %715 = dma.done %s711, 32
        $region64: #{tpu_custom_call.1} parent=55 // pred_fallthru
          _
      $region56: #{tpu_custom_call.1} parent=5 // pred_fallthru
        _
    $region6: #{tpu_custom_call.1} parent=1 // loop_footer
      %s26 = sadd.s32 1, %s22
    $region7: #{tpu_custom_call.1} parent=1 // loop_footer_branch
      %21 = sbr.rel target = $region3
    $region8: #{tpu_custom_call.1} parent=1 // loop_exit
      _
    %716 = vsyncpa [#allocation5], 1
    %s717 = scalar_lea.sflag [#allocation5], 1
    %718 = vsyncpa %s717, 1
    %719 = vsyncpa [#allocation6], 1
    %s720 = scalar_lea.sflag [#allocation6], 1
    %721 = vsyncpa %s720, 1
    %722 = vsyncpa [#allocation13], 1
    %s723 = scalar_lea.sflag [#allocation13], 1
    %724 = vsyncpa %s723, 1
    %725 = vsyncpa [#allocation7], 1
    %s726 = scalar_lea.sflag [#allocation7], 1
    %727 = vsyncpa %s726, 1
    %728 = vsyncpa [#allocation9], 1

</llo_original>
